<compile_context>
chip_gen: v5e
topology: v5e:2x2
jax: 0.10.0
libtpu: 0.0.40
codegen_flags: <defaults>
</compile_context>

<pallas_src>
import jax
import jax.numpy as jnp
from jax import lax
from jax.experimental import pallas as pl
from jax.experimental.pallas import tpu as pltpu

IGNORE_INDEX = -100


def _masked_ce_kernel(logits_ref, labels_ref, weight_ref, out_ref):
    # logits_ref: (TM, C) f32/bf16, labels_ref: (TM, 1) i32 (mask already folded
    # in as IGNORE_INDEX), weight_ref: (1, C) f32, out_ref: (8, 128) f32.
    x = logits_ref[...].astype(jnp.float32)                 # (TM, C)
    lbl = labels_ref[...]                                   # (TM, 1) i32

    # Stable log-sum-exp over classes (lane axis -> XLU reduce, exp -> EUP).
    m = jnp.max(x, axis=-1, keepdims=True)                  # (TM, 1)
    lse = m + jnp.log(jnp.sum(jnp.exp(x - m), axis=-1, keepdims=True))

    tm, c = x.shape
    iota = lax.broadcasted_iota(jnp.int32, (tm, c), 1)
    # Fused one-hot gather of weight and target logit (single select + reduce):
    #   sum_c [c==label] * w[c] * (lse - x[:, c]) == w[label] * (lse - x[label])
    wsel = jnp.where(iota == lbl, weight_ref[...], jnp.float32(0.0))   # (TM, C)
    loss_row = jnp.sum(wsel * (lse - x), axis=-1, keepdims=True)       # (TM, 1)

    # Zero ignored tokens and padded/garbage tail rows (their label is -100, so
    # wsel is all-zero anyway; the where also kills any NaN coming from garbage
    # logits in the out-of-bounds tail block).
    valid = lbl != jnp.int32(IGNORE_INDEX)
    loss_row = jnp.where(valid, loss_row, jnp.float32(0.0))

    partial = jnp.sum(loss_row, keepdims=True)              # (1, 1)
    out_ref[...] = jnp.broadcast_to(partial, out_ref.shape)  # lane-dense store


def _round_up(x, m):
    return ((x + m - 1) // m) * m


def _choose_tm(n, c, tm_cap=None):
    """Row-tile size: large enough to amortize per-grid-step overhead (matters
    when C is small), small enough that the f32 working tile (TM, C) stays
    around <= 2 MiB so the double-buffered input + elementwise intermediates
    comfortably fit VMEM on v5e/v6e/v7x."""
    by_vmem = max(8, (((2 << 20) // (4 * max(c, 1))) // 8) * 8)
    cap = 8192 if tm_cap is None else max(8, (int(tm_cap) // 8) * 8)
    tm = min(by_vmem, cap, _round_up(n, 8))
    return max(8, (tm // 8) * 8)


def masked_seq_cross_entropy_loss(logits, labels, mask=None, weight=None, *, tm=None):
    """logits: (B, S, C) f32/bf16, labels: (B, S) int, mask: (B, S) or None,
    weight: (C,) f32 or None.  Returns scalar loss (== PyTorch module)."""
    B, S, C = logits.shape
    N = B * S

    flat_logits = logits.reshape(N, C)
    if flat_logits.dtype not in (jnp.float32, jnp.bfloat16):
        flat_logits = flat_logits.astype(jnp.float32)
    itemsize = flat_logits.dtype.itemsize

    # Fold the mask into the labels (torch.where(active_loss, labels, -100)).
    lbl = labels.reshape(N).astype(jnp.int32)
    if mask is not None:
        lbl = jnp.where(mask.reshape(N) == 1, lbl, jnp.int32(IGNORE_INDEX))

    tm_eff = _choose_tm(N, C, tm_cap=tm)
    grid = pl.cdiv(N, tm_eff)
    n_pad = grid * tm_eff

    # Only the (tiny) labels array is padded; the logits tail block relies on
    # Pallas edge handling and is masked out because its labels are -100.
    lbl = jnp.pad(lbl, (0, n_pad - N), constant_values=IGNORE_INDEX).reshape(n_pad, 1)

    if weight is None:
        w = jnp.ones((1, C), dtype=jnp.float32)
    else:
        w = jnp.asarray(weight, dtype=jnp.float32).reshape(1, C)

    # Explicit VMEM limit (scoped defaults: 16 MiB v5e, 32 MiB v6e/v7x):
    # double-buffered inputs + ~8 f32 elementwise intermediates + headroom.
    tile_in = tm_eff * C * itemsize
    tile_f32 = tm_eff * C * 4
    vmem_need = 2 * (tile_in + tm_eff * 4) + 8 * tile_f32 + 2 * 8 * 128 * 4 + 2 * C * 4
    vmem_limit = int(min(max(vmem_need + (4 << 20), 16 << 20), 56 << 20))

    per_block = pl.pallas_call(
        _masked_ce_kernel,
        out_shape=jax.ShapeDtypeStruct((grid * 8, 128), jnp.float32),
        grid_spec=pltpu.PrefetchScalarGridSpec(
            num_scalar_prefetch=0,
            grid=(grid,),
            in_specs=[
                pl.BlockSpec((tm_eff, C), lambda i: (i, 0)),   # logits tile
                pl.BlockSpec((tm_eff, 1), lambda i: (i, 0)),   # (masked) labels
                pl.BlockSpec((1, C), lambda i: (0, 0)),        # class weights
            ],
            out_specs=pl.BlockSpec((8, 128), lambda i: (i, 0)),  # per-block partial
        ),
        compiler_params=pltpu.CompilerParams(
            dimension_semantics=("parallel",),
            vmem_limit_bytes=vmem_limit,
        ),
    )(flat_logits, lbl, w)

    # loss.view(-1, seq_len).sum(1).mean() == (sum over all tokens) / B
    partials = per_block[::8, 0]                 # one partial per grid block
    return partials.sum() / jnp.float32(B)


def _reference(logits, labels, mask, weight):
    # pure-JAX reference of the PyTorch semantics
    B, S, C = logits.shape
    lbl = labels.reshape(-1)
    if mask is not None:
        lbl = jnp.where(mask.reshape(-1) == 1, lbl, IGNORE_INDEX)
    x = logits.reshape(-1, C).astype(jnp.float32)
    logp = jax.nn.log_softmax(x, axis=-1)
    safe = jnp.where(lbl == IGNORE_INDEX, 0, lbl)
    nll = -jnp.take_along_axis(logp, safe[:, None], axis=-1)[:, 0]
    w = weight[safe] if weight is not None else jnp.ones_like(nll)
    per_tok = jnp.where(lbl == IGNORE_INDEX, 0.0, w * nll)
    return per_tok.reshape(B, S).sum(axis=1).mean()


if __name__ == "__main__":
    key = jax.random.PRNGKey(0)
    B, S, C = 2, 8, 16  # batch, seq_len, num_labels
    k1, k2, k3, k4 = jax.random.split(key, 4)

    # Case 1: f32 logits, mask + class weights.
    logits = jax.random.normal(k1, (B, S, C), dtype=jnp.float32)
    labels = jax.random.randint(k2, (B, S), 0, C, dtype=jnp.int32)
    mask = (jax.random.uniform(k3, (B, S)) > 0.3).astype(jnp.int32)
    weight = jax.random.uniform(k4, (C,), minval=0.5, maxval=1.5, dtype=jnp.float32)

    loss = masked_seq_cross_entropy_loss(logits, labels, mask=mask, weight=weight)
    loss = jax.block_until_ready(loss)
    ref = _reference(logits, labels, mask, weight)
    assert jnp.allclose(loss, ref, rtol=1e-5, atol=1e-5), (loss, ref)

    # Case 2: non-divisible N (tail block), no mask / no weight, forced tiny tile.
    B2, S2 = 3, 5
    logits2 = jax.random.normal(k1, (B2, S2, C), dtype=jnp.float32)
    labels2 = jax.random.randint(k2, (B2, S2), 0, C, dtype=jnp.int32)
    loss2 = masked_seq_cross_entropy_loss(logits2, labels2, tm=8)
    loss2 = jax.block_until_ready(loss2)
    ref2 = _reference(logits2, labels2, None, None)
    assert jnp.allclose(loss2, ref2, rtol=1e-5, atol=1e-5), (loss2, ref2)

    # Case 3: bf16 logits (half DMA traffic), mask + weights, multi-block grid.
    B3, S3, C3 = 4, 6, 21
    logits3 = jax.random.normal(k1, (B3, S3, C3), dtype=jnp.bfloat16)
    labels3 = jax.random.randint(k2, (B3, S3), 0, C3, dtype=jnp.int32)
    mask3 = (jax.random.uniform(k3, (B3, S3)) > 0.3).astype(jnp.int32)
    weight3 = jax.random.uniform(k4, (C3,), minval=0.5, maxval=1.5, dtype=jnp.float32)
    loss3 = masked_seq_cross_entropy_loss(logits3, labels3, mask=mask3, weight=weight3, tm=8)
    loss3 = jax.block_until_ready(loss3)
    ref3 = _reference(logits3, labels3, mask3, weight3)
    assert jnp.allclose(loss3, ref3, rtol=1e-3, atol=1e-3), (loss3, ref3)

    print("KERNEL_OK")
</pallas_src>

<mosaic_0001>
module attributes {stable_mosaic.version = 11 : i64} {
  func.func @_masked_ce_kernel(%arg0: i32, %arg1: memref<16x16xf32, #tpu.memory_space<vmem>>, %arg2: memref<16x1xi32, #tpu.memory_space<vmem>>, %arg3: memref<1x16xf32, #tpu.memory_space<vmem>>, %arg4: memref<8x128xf32, #tpu.memory_space<vmem>>) attributes {dimension_semantics = [#tpu.dimension_semantics<parallel>], iteration_bounds = array<i64: 1>, scalar_prefetch = 0 : i64, scratch_operands = 0 : i64, tpu.core_type = #tpu.core_type<tc>, window_params = [{transform_indices = @transform_0, window_bounds = array<i64: 16, 16>}, {transform_indices = @transform_1, window_bounds = array<i64: 16, 1>}, {pipeline_mode = #tpu.pipeline_mode<synchronous>, transform_indices = @transform_2, window_bounds = array<i64: 1, 16>}, {transform_indices = @transform_3, window_bounds = array<i64: 8, 128>}]} {
    %c0 = arith.constant 0 : index
    %c0_0 = arith.constant 0 : index
    %0 = vector.load %arg1[%c0, %c0_0] : memref<16x16xf32, #tpu.memory_space<vmem>>, vector<16x16xf32>
    %c0_1 = arith.constant 0 : index
    %c0_2 = arith.constant 0 : index
    %1 = vector.load %arg2[%c0_1, %c0_2] : memref<16x1xi32, #tpu.memory_space<vmem>>, vector<16x1xi32>
    %cst = arith.constant dense<0xFF800000> : vector<16xf32>
    %2 = vector.multi_reduction <maximumf>, %0, %cst [1] : vector<16x16xf32> to vector<16xf32>
    %3 = vector.shape_cast %2 : vector<16xf32> to vector<16x1xf32>
    %4 = vector.broadcast %3 : vector<16x1xf32> to vector<16x16xf32>
    %5 = arith.subf %0, %4 : vector<16x16xf32>
    %6 = math.exp %5 : vector<16x16xf32>
    %cst_3 = arith.constant dense<0.000000e+00> : vector<16xf32>
    %7 = vector.multi_reduction <add>, %6, %cst_3 [1] : vector<16x16xf32> to vector<16xf32>
    %8 = vector.shape_cast %7 : vector<16xf32> to vector<16x1xf32>
    %9 = math.log %8 : vector<16x1xf32>
    %10 = arith.addf %3, %9 : vector<16x1xf32>
    %11 = tpu.iota {dimensions = array<i32: 1>} : vector<16x16xi32>
    %12 = vector.broadcast %1 : vector<16x1xi32> to vector<16x16xi32>
    %13 = arith.cmpi eq, %11, %12 : vector<16x16xi32>
    %c0_4 = arith.constant 0 : index
    %c0_5 = arith.constant 0 : index
    %14 = vector.load %arg3[%c0_4, %c0_5] : memref<1x16xf32, #tpu.memory_space<vmem>>, vector<1x16xf32>
    %cst_6 = arith.constant 0.000000e+00 : f32
    %15 = vector.shape_cast %14 : vector<1x16xf32> to vector<1x16xf32>
    %16 = vector.broadcast %15 : vector<1x16xf32> to vector<16x16xf32>
    %17 = vector.broadcast %cst_6 : f32 to vector<16x16xf32>
    %18 = arith.select %13, %16, %17 : vector<16x16xi1>, vector<16x16xf32>
    %19 = vector.broadcast %10 : vector<16x1xf32> to vector<16x16xf32>
    %20 = arith.subf %19, %0 : vector<16x16xf32>
    %21 = arith.mulf %18, %20 : vector<16x16xf32>
    %cst_7 = arith.constant dense<0.000000e+00> : vector<16xf32>
    %22 = vector.multi_reduction <add>, %21, %cst_7 [1] : vector<16x16xf32> to vector<16xf32>
    %23 = vector.shape_cast %22 : vector<16xf32> to vector<16x1xf32>
    %c-100_i32 = arith.constant -100 : i32
    %24 = vector.broadcast %c-100_i32 : i32 to vector<16x1xi32>
    %25 = arith.cmpi ne, %1, %24 : vector<16x1xi32>
    %cst_8 = arith.constant 0.000000e+00 : f32
    %26 = vector.broadcast %cst_8 : f32 to vector<16x1xf32>
    %27 = arith.select %25, %23, %26 : vector<16x1xi1>, vector<16x1xf32>
    %28 = vector.shape_cast %27 : vector<16x1xf32> to vector<1x16x1xf32>
    %cst_9 = arith.constant dense<0.000000e+00> : vector<1xf32>
    %29 = vector.multi_reduction <add>, %28, %cst_9 [1, 2] : vector<1x16x1xf32> to vector<1xf32>
    %30 = vector.shape_cast %29 : vector<1xf32> to vector<1x1x1xf32>
    %31 = vector.extract %30[0, 0, 0] : f32 from vector<1x1x1xf32>
    %32 = vector.broadcast %31 : f32 to vector<1x1xf32>
    %33 = vector.shape_cast %32 : vector<1x1xf32> to vector<1x1xf32>
    %34 = vector.broadcast %33 : vector<1x1xf32> to vector<8x128xf32>
    %c0_10 = arith.constant 0 : index
    %c0_11 = arith.constant 0 : index
    %35 = vector.load %arg4[%c0_10, %c0_11] : memref<8x128xf32, #tpu.memory_space<vmem>>, vector<8x128xf32>
    tpu.vector_store %arg4[%c0_10, %c0_11], %34 {strides = array<i32>} : memref<8x128xf32, #tpu.memory_space<vmem>>, vector<8x128xf32>,
    return
  }
  func.func @transform_0(%arg0: i32) -> (i32, i32) {
    %c0_i32 = arith.constant 0 : i32
    %c0_i32_0 = arith.constant 0 : i32
    return %arg0, %c0_i32 : i32, i32
  }
  func.func @transform_1(%arg0: i32) -> (i32, i32) {
    %c0_i32 = arith.constant 0 : i32
    %c0_i32_0 = arith.constant 0 : i32
    return %arg0, %c0_i32 : i32, i32
  }
  func.func @transform_2(%arg0: i32) -> (i32, i32) {
    %c0_i32 = arith.constant 0 : i32
    %c0_i32_0 = arith.constant 0 : i32
    %c0_i32_1 = arith.constant 0 : i32
    return %c0_i32, %c0_i32_0 : i32, i32
  }
  func.func @transform_3(%arg0: i32) -> (i32, i32) {
    %c0_i32 = arith.constant 0 : i32
    %c0_i32_0 = arith.constant 0 : i32
    return %arg0, %c0_i32 : i32, i32
  }
}

</mosaic_0001>

<llo_original>
// kernel: tpu_custom_call.1
$region0: #{tpu_custom_call.1}
  #allocation0 [shape = 'u32[]', space=smem, size = 0x4, offset = 0x4, fixed_abs, tag = 'smem constant byte address 0x4 - core index']
  #allocation1 [shape = 'u32[72,128]{1,0:T(1,128)}', space=vmem, size = 0x9000, scoped, tag = 'internal scratch']
  %s0 = inlined_call_operand.vmem [shape: f32[16,16], index: 0, kind: input, shape index: {}]
  %s1 = inlined_call_operand.vmem [shape: s32[16,1], index: 1, kind: input, shape index: {}]
  %s2 = inlined_call_operand.vmem [shape: f32[1,16], index: 2, kind: input, shape index: {}]
  %s3 = inlined_call_operand.hbm [shape: f32[8,128], index: 3, kind: output, shape index: {}]
  %s4 = sld [smem:[#allocation0]]
  $region22: #{tpu_custom_call.1} parent=0
    _
  %s6 = ssub.s32 1, %s4
  %s7 = scalar_select 0, %s6, %s4
  $region1: #{tpu_custom_call.1} parent=0
    #allocation2 [shape = 'u8[4096]{0}', space=vmem, size = 0x1000, scoped, tag = 'output window, operand 0, single buffered']
    #allocation3 [shape = 's32[1]{0}', space=sflag, size = 0x4, scoped, tag = 'scoped memory for tpu_custom_call.1']
    %8 = vsyncpa [#allocation3], 0
    // Predicated region
    $region2: #{tpu_custom_call.1} parent=1 // pred_check
      _
    $region3: #{tpu_custom_call.1} parent=1 // pred_check_branch
      %10 = sbr.rel (0) target = $region5
    $region4: #{tpu_custom_call.1} parent=1 // pred_region
      _
    $region5: #{tpu_custom_call.1} parent=1 // pred_fallthru
      _
    // Predicated region
    $region6: #{tpu_custom_call.1} parent=1 // pred_check
      _
    $region7: #{tpu_custom_call.1} parent=1 // pred_check_branch
      %12 = sbr.rel (0) target = $region9
    $region8: #{tpu_custom_call.1} parent=1 // pred_region
      _
    $region9: #{tpu_custom_call.1} parent=1 // pred_fallthru
      _
    // Predicated region
    $region10: #{tpu_custom_call.1} parent=1 // pred_check
      _
    $region11: #{tpu_custom_call.1} parent=1 // pred_check_branch
      %14 = sbr.rel (0) target = $region13
    $region12: #{tpu_custom_call.1} parent=1 // pred_region
      _
    $region13: #{tpu_custom_call.1} parent=1 // pred_fallthru
      _
    %v15 = vld [vmem:[%s0] sm:$0xff]
    %v16 = vld [vmem:[%s0 + $0x8] sm:$0xff]
    %v17 = vld [vmem:[%s1] sm:$0xff]
    %v18 = vld [vmem:[%s1 + $0x8] sm:$0xff]
    %vm19 = vcmask 130048
    %v20 = vsel %vm19, %v15, -inf
    %21 = vmax.xlane.f32.xlu0 %v20
    %v22 = vpop.xlane.xlu0 %21
    %v23 = vsel %vm19, %v16, -inf
    %24 = vmax.xlane.f32.xlu0 %v23
    %v25 = vpop.xlane.xlu0 %24
    %v26 = vsub.f32 %v15, %v22
    %v27 = vsub.f32 %v16, %v25
    %v28 = vmul.f32 %v26, 1.442695
    %v29 = vpow.pop %v28
    %v30 = vmul.f32 %v27, 1.442695
    %v31 = vpow.pop %v30
    %v32 = vsel %vm19, %v29, 0.0
    %33 = vadd.xlane.f32.xlu0 %v32
    %v34 = vpop.xlane.xlu0 %33
    %v35 = vsel %vm19, %v31, 0.0
    %36 = vadd.xlane.f32.xlu0 %v35
    %v37 = vpop.xlane.xlu0 %36
    %v38 = vlog2.pop %v34
    %v39 = vmul.f32 %v38, 0.6931472
    %v40 = vlog2.pop %v37
    %v41 = vmul.f32 %v40, 0.6931472
    %v42 = vadd.f32 %v22, %v39
    %v43 = vadd.f32 %v25, %v41
    %v44 = vlaneseq
    %v45 = vand.u32 %v44, 127
    %46 = vset.pattern.permute.xlu0 0
    %47 = vperm.xlu0 %46, %v17
    %v48 = vpop.permute.xlu0 %47
    %49 = vset.pattern.permute.xlu0 0
    %50 = vperm.xlu0 %49, %v18
    %v51 = vpop.permute.xlu0 %50
    %vm52 = vcmp.eq.s32.totalorder %v45, %v48
    %vm53 = vcmp.eq.s32.totalorder %v45, %v51
    %v54 = vld [vmem:[%s2] sm:$0x1]
    %v56 = vperm.slane %v54, 0
    %v58 = vsel %vm52, %v56, 0.0
    %v59 = vsel %vm53, %v56, 0.0
    %v60 = vsub.f32 %v42, %v15
    %v61 = vsub.f32 %v43, %v16
    %v62 = vmul.f32 %v58, %v60
    %v63 = vmul.f32 %v59, %v61
    %v64 = vsel %vm19, %v62, 0.0
    %65 = vadd.xlane.f32.xlu0 %v64
    %v66 = vpop.xlane.xlu0 %65
    %v67 = vsel %vm19, %v63, 0.0
    %68 = vadd.xlane.f32.xlu0 %v67
    %v69 = vpop.xlane.xlu0 %68
    %vm70 = vcmp.ne.s32.totalorder %v17, 4294967196
    %vm71 = vcmp.ne.s32.totalorder %v18, 4294967196
    %v72 = vsel %vm70, %v66, 0.0
    %v73 = vsel %vm71, %v69, 0.0
    %vm74 = vcmask 7168
    %v75 = vsel %vm74, %v72, 0.0
    %v76 = vsel %vm74, %v73, 0.0
    %v77 = vadd.f32 %v75, %v76
    %78 = vadd.xlane.f32.xlu0 %v77
    %v79 = vpop.xlane.xlu0 %78
    %v80 = vrot.slane %v79, 4
    %v81 = vadd.f32 %v79, %v80
    %v82 = vrot.slane %v81, 2
    %v83 = vadd.f32 %v81, %v82
    %v84 = vrot.slane %v83, 1
    %v85 = vadd.f32 %v83, %v84
    %s86 = vtos %v85
    %v87 = vstv %s86
    %88 = vst [vmem:[#allocation2] sm:$0xff] %v87
    // Predicated region
    $region14: #{tpu_custom_call.1} parent=1 // pred_check
      _
    $region15: #{tpu_custom_call.1} parent=1 // pred_check_branch
      %90 = sbr.rel (0) target = $region17
    $region16: #{tpu_custom_call.1} parent=1 // pred_region
      %92 = vsyncadd [#allocation3], 0
      %s94 = sshll.u32 [#allocation2], 4
      %s95 = int_to_ptr.vmem [resolvable:$true] %s94
      %s96 = sshll.u32 %s3, 4
      %s97 = int_to_ptr.hbm [resolvable:$true] %s96
      %99 = dma.vmem_to_hbm [thread:$0]  %s95, 128, %s97, [#allocation3]
    $region17: #{tpu_custom_call.1} parent=1 // pred_fallthru
      _
    // Predicated region
    $region18: #{tpu_custom_call.1} parent=1 // pred_check
      _
    $region19: #{tpu_custom_call.1} parent=1 // pred_check_branch
      %101 = sbr.rel (0) target = $region21
    $region20: #{tpu_custom_call.1} parent=1 // pred_region
      %103 = dma.done [#allocation3], 128
    $region21: #{tpu_custom_call.1} parent=1 // pred_fallthru
      _
    %104 = vsyncpa [#allocation3], 1

</llo_original>
